<compile_context>
chip_gen: v7x
topology: tpu7x:2x2x1
jax: 0.10.0
libtpu: 0.0.40
codegen_flags: <defaults>
</compile_context>

<pallas_src>
import jax
import jax.numpy as jnp
from jax import lax
from jax.experimental import pallas as pl
from jax.experimental.pallas import tpu as pltpu

LANES = 128


def _round_up(x: int, m: int) -> int:
    return ((x + m - 1) // m) * m


def _make_combined_loss_kernel(*, n_elems, w_mse, w_mae, tile_rows, steps,
                               total_rows, needs_mask):
    inv_n = 1.0 / float(n_elems)

    def kernel(pred_ref, tgt_ref, out_ref, acc_ref):
        j = pl.program_id(1)

        # Reset the vector accumulators at the start of each shard's inner loop.
        @pl.when(j == 0)
        def _():
            acc_ref[...] = jnp.zeros_like(acc_ref)

        # Accumulate in f32 regardless of input dtype (bf16 inputs halve HBM traffic;
        # the cast after load costs nothing extra in HBM bytes).
        p = pred_ref[...].astype(jnp.float32)
        t = tgt_ref[...].astype(jnp.float32)
        diff = p - t

        if needs_mask:
            # Mask rows beyond the true row count (covers the partial last block and
            # any clamped/duplicated blocks from uneven shard splits).
            s = pl.program_id(0)
            row0 = (s * steps + j) * tile_rows
            row_ids = row0 + lax.broadcasted_iota(jnp.int32, diff.shape, 0)
            diff = jnp.where(row_ids < total_rows, diff, 0.0)

        # Keep the hot loop on the VPU: reduce only the vreg-group axis
        # (pure elementwise adds of (8, 128) tiles) into the VMEM accumulator.
        d3 = diff.reshape(tile_rows // 8, 8, LANES)
        acc_ref[0, :, :] += jnp.sum(d3 * d3, axis=0)     # running sum of squared error
        acc_ref[1, :, :] += jnp.sum(jnp.abs(d3), axis=0)  # running sum of absolute error

        # Finalize: single cross-lane/sublane reduce, weighted combination.
        @pl.when(j == pl.num_programs(1) - 1)
        def _():
            sq_sum = jnp.sum(acc_ref[0, :, :])
            ab_sum = jnp.sum(acc_ref[1, :, :])
            partial = (jnp.float32(w_mse) * sq_sum
                       + jnp.float32(w_mae) * ab_sum) * jnp.float32(inv_n)
            out_ref[...] = jnp.full(out_ref.shape, partial, dtype=jnp.float32)

    return kernel


def combined_loss(predictions, targets, weights=None, *, tile_rows=2048):
    """Pallas equivalent of CombinedLoss.forward: w_mse*MSE + w_mae*MAE (mean reductions)."""
    if weights is None:
        weights = {}
    w_mse = float(weights.get("mse", 0.5))
    w_mae = float(weights.get("mae", 0.5))

    assert predictions.shape == targets.shape
    n_elems = int(predictions.size)

    # Flatten to a lane-dense (ROWS, 128) slab. reshape is free; only pad the tiny
    # sub-vreg remainder when n_elems is not a multiple of 128 (padded positions
    # contribute 0 to both sums since pred == tgt == 0 there).
    p_flat = predictions.reshape(-1)
    t_flat = targets.reshape(-1)
    lane_pad = (-n_elems) % LANES
    if lane_pad:
        p_flat = jnp.pad(p_flat, (0, lane_pad))
        t_flat = jnp.pad(t_flat, (0, lane_pad))
    total_rows = (n_elems + lane_pad) // LANES
    p2d = p_flat.reshape(total_rows, LANES)
    t2d = t_flat.reshape(total_rows, LANES)

    # Tiny-input fallback: need at least 8 rows (one sublane tile).
    if total_rows < 8:
        row_pad = 8 - total_rows
        p2d = jnp.pad(p2d, ((0, row_pad), (0, 0)))
        t2d = jnp.pad(t2d, ((0, row_pad), (0, 0)))
        total_rows += row_pad

    # Big blocks (multiple of 8 rows, never larger than the slab so block starts
    # always stay in bounds; the partial last block is handled by the in-kernel mask).
    tile_rows = _round_up(max(int(tile_rows), 8), 8)
    tile_rows = min(tile_rows, (total_rows // 8) * 8)

    total_blocks = -(-total_rows // tile_rows)
    num_shards = 2 if total_blocks >= 2 else 1          # v7x: split across TensorCores
    steps = -(-total_blocks // num_shards)
    needs_mask = (num_shards * steps * tile_rows != total_rows)

    kernel = _make_combined_loss_kernel(
        n_elems=n_elems, w_mse=w_mse, w_mae=w_mae,
        tile_rows=tile_rows, steps=steps,
        total_rows=total_rows, needs_mask=needs_mask)

    last_block = total_blocks - 1

    def in_index_map(s, j):
        # Clamp so uneven shard splits never produce a fully out-of-bounds block;
        # duplicated reads are zeroed by the in-kernel mask.
        return (jnp.minimum(s * steps + j, last_block), 0)

    bytes_per_elem = predictions.dtype.itemsize + targets.dtype.itemsize
    cost = pl.CostEstimate(
        flops=5 * n_elems,
        transcendentals=0,
        bytes_accessed=n_elems * bytes_per_elem + num_shards * LANES * 4,
    )

    out = pl.pallas_call(
        kernel,
        out_shape=jax.ShapeDtypeStruct((num_shards, 1, LANES), jnp.float32),
        grid_spec=pltpu.PrefetchScalarGridSpec(
            num_scalar_prefetch=0,
            grid=(num_shards, steps),
            in_specs=[
                pl.BlockSpec((tile_rows, LANES), in_index_map),
                pl.BlockSpec((tile_rows, LANES), in_index_map),
            ],
            out_specs=pl.BlockSpec((1, 1, LANES), lambda s, j: (s, 0, 0)),
            scratch_shapes=[pltpu.VMEM((2, 8, LANES), jnp.float32)],
        ),
        compiler_params=pltpu.CompilerParams(
            dimension_semantics=("parallel", "arbitrary"),
        ),
        cost_estimate=cost,
    )(p2d, t2d)

    # Sum the per-shard weighted partials (lane 0 of each shard's output row).
    return jnp.sum(out[:, 0, 0])


def _reference_loss(predictions, targets, weights):
    w_mse = weights.get("mse", 0.5)
    w_mae = weights.get("mae", 0.5)
    diff = predictions.astype(jnp.float32) - targets.astype(jnp.float32)
    return w_mse * jnp.mean(diff * diff) + w_mae * jnp.mean(jnp.abs(diff))


if __name__ == "__main__":
    key = jax.random.PRNGKey(0)

    # Test 1: typical regression output (NCHW), exact multiple of the lane width.
    k1, k2, k3, k4 = jax.random.split(key, 4)
    B, C, H, W = 2, 4, 16, 16
    predictions = jax.random.normal(k1, (B, C, H, W), dtype=jnp.float32)
    targets = jax.random.normal(k2, (B, C, H, W), dtype=jnp.float32)
    weights = {"mse": 0.7, "mae": 0.3}

    loss = jax.block_until_ready(combined_loss(predictions, targets, weights))
    ref = _reference_loss(predictions, targets, weights)
    assert jnp.allclose(loss, ref, rtol=1e-5, atol=1e-5), (loss, ref)

    # Test 2: ragged shape (exercises lane pad, in-kernel row mask, 2-shard grid)
    # with default weights (mse=0.5, mae=0.5).
    predictions2 = jax.random.normal(k3, (3, 5, 33, 29), dtype=jnp.float32)
    targets2 = jax.random.normal(k4, (3, 5, 33, 29), dtype=jnp.float32)

    loss2 = jax.block_until_ready(combined_loss(predictions2, targets2))
    ref2 = _reference_loss(predictions2, targets2, {})
    assert jnp.allclose(loss2, ref2, rtol=1e-5, atol=1e-5), (loss2, ref2)

    print("KERNEL_OK")
</pallas_src>

<mosaic_0001>
module attributes {stable_mosaic.version = 11 : i64} {
  func.func @kernel(%arg0: i32, %arg1: i32, %arg2: memref<16x128xf32, #tpu.memory_space<vmem>>, %arg3: memref<16x128xf32, #tpu.memory_space<vmem>>, %arg4: memref<1x1x128xf32, #tpu.memory_space<vmem>>, %arg5: memref<2x8x128xf32, #tpu.memory_space<vmem>>) attributes {dimension_semantics = [#tpu.dimension_semantics<parallel>, #tpu.dimension_semantics<arbitrary>], iteration_bounds = array<i64: 1, 1>, scalar_prefetch = 0 : i64, scratch_operands = 1 : i64, tpu.core_type = #tpu.core_type<tc>, window_params = [{transform_indices = @transform_0, window_bounds = array<i64: 16, 128>}, {transform_indices = @transform_1, window_bounds = array<i64: 16, 128>}, {transform_indices = @transform_2, window_bounds = array<i64: 1, 1, 128>}]} {
    %c0_i32 = arith.constant 0 : i32
    %0 = arith.cmpi eq, %arg1, %c0_i32 : i32
    %1 = arith.extui %0 : i1 to i32
    %c0_i32_0 = arith.constant 0 : i32
    %2 = arith.cmpi ne, %1, %c0_i32_0 : i32
    scf.if %2 {
      %cst_18 = arith.constant 0.000000e+00 : f32
      %26 = vector.broadcast %cst_18 : f32 to vector<2x8x128xf32>
      %c0_19 = arith.constant 0 : index
      %c0_20 = arith.constant 0 : index
      %c0_21 = arith.constant 0 : index
      %27 = vector.load %arg5[%c0_19, %c0_20, %c0_21] : memref<2x8x128xf32, #tpu.memory_space<vmem>>, vector<2x8x128xf32>
      tpu.vector_store %arg5[%c0_19, %c0_20, %c0_21], %26 {strides = array<i32>} : memref<2x8x128xf32, #tpu.memory_space<vmem>>, vector<2x8x128xf32>,
    } else {
    }
    %c0 = arith.constant 0 : index
    %c0_1 = arith.constant 0 : index
    %3 = vector.load %arg2[%c0, %c0_1] : memref<16x128xf32, #tpu.memory_space<vmem>>, vector<16x128xf32>
    %c0_2 = arith.constant 0 : index
    %c0_3 = arith.constant 0 : index
    %4 = vector.load %arg3[%c0_2, %c0_3] : memref<16x128xf32, #tpu.memory_space<vmem>>, vector<16x128xf32>
    %5 = arith.subf %3, %4 : vector<16x128xf32>
    %6 = vector.shape_cast %5 : vector<16x128xf32> to vector<2x8x128xf32>
    %c0_4 = arith.constant 0 : index
    %c0_5 = arith.constant 0 : index
    %c0_6 = arith.constant 0 : index
    %7 = vector.load %arg5[%c0_4, %c0_5, %c0_6] : memref<2x8x128xf32, #tpu.memory_space<vmem>>, vector<1x8x128xf32>
    %8 = vector.shape_cast %7 : vector<1x8x128xf32> to vector<8x128xf32>
    %9 = arith.mulf %6, %6 : vector<2x8x128xf32>
    %cst = arith.constant dense<0.000000e+00> : vector<8x128xf32>
    %10 = vector.multi_reduction <add>, %9, %cst [0] : vector<2x8x128xf32> to vector<8x128xf32>
    %11 = arith.addf %8, %10 : vector<8x128xf32>
    %c0_7 = arith.constant 0 : index
    %c0_8 = arith.constant 0 : index
    %c0_9 = arith.constant 0 : index
    %12 = vector.load %arg5[%c0_7, %c0_8, %c0_9] : memref<2x8x128xf32, #tpu.memory_space<vmem>>, vector<1x8x128xf32>
    %13 = vector.shape_cast %12 : vector<1x8x128xf32> to vector<8x128xf32>
    %14 = vector.shape_cast %11 : vector<8x128xf32> to vector<1x8x128xf32>
    tpu.vector_store %arg5[%c0_7, %c0_8, %c0_9], %14 {strides = array<i32>} : memref<2x8x128xf32, #tpu.memory_space<vmem>>, vector<1x8x128xf32>,
    %c1 = arith.constant 1 : index
    %c0_10 = arith.constant 0 : index
    %c0_11 = arith.constant 0 : index
    %15 = vector.load %arg5[%c1, %c0_10, %c0_11] : memref<2x8x128xf32, #tpu.memory_space<vmem>>, vector<1x8x128xf32>
    %16 = vector.shape_cast %15 : vector<1x8x128xf32> to vector<8x128xf32>
    %17 = math.absf %6 : vector<2x8x128xf32>
    %cst_12 = arith.constant dense<0.000000e+00> : vector<8x128xf32>
    %18 = vector.multi_reduction <add>, %17, %cst_12 [0] : vector<2x8x128xf32> to vector<8x128xf32>
    %19 = arith.addf %16, %18 : vector<8x128xf32>
    %c1_13 = arith.constant 1 : index
    %c0_14 = arith.constant 0 : index
    %c0_15 = arith.constant 0 : index
    %20 = vector.load %arg5[%c1_13, %c0_14, %c0_15] : memref<2x8x128xf32, #tpu.memory_space<vmem>>, vector<1x8x128xf32>
    %21 = vector.shape_cast %20 : vector<1x8x128xf32> to vector<8x128xf32>
    %22 = vector.shape_cast %19 : vector<8x128xf32> to vector<1x8x128xf32>
    tpu.vector_store %arg5[%c1_13, %c0_14, %c0_15], %22 {strides = array<i32>} : memref<2x8x128xf32, #tpu.memory_space<vmem>>, vector<1x8x128xf32>,
    %c0_i32_16 = arith.constant 0 : i32
    %23 = arith.cmpi eq, %arg1, %c0_i32_16 : i32
    %24 = arith.extui %23 : i1 to i32
    %c0_i32_17 = arith.constant 0 : i32
    %25 = arith.cmpi ne, %24, %c0_i32_17 : i32
    scf.if %25 {
      %c0_18 = arith.constant 0 : index
      %c0_19 = arith.constant 0 : index
      %c0_20 = arith.constant 0 : index
      %26 = vector.load %arg5[%c0_18, %c0_19, %c0_20] : memref<2x8x128xf32, #tpu.memory_space<vmem>>, vector<1x8x128xf32>
      %27 = vector.shape_cast %26 : vector<1x8x128xf32> to vector<8x128xf32>
      %28 = vector.shape_cast %27 : vector<8x128xf32> to vector<1x8x128xf32>
      %cst_21 = arith.constant dense<0.000000e+00> : vector<1xf32>
      %29 = vector.multi_reduction <add>, %28, %cst_21 [1, 2] : vector<1x8x128xf32> to vector<1xf32>
      %30 = vector.shape_cast %29 : vector<1xf32> to vector<1x1x1xf32>
      %31 = vector.extract %30[0, 0, 0] : f32 from vector<1x1x1xf32>
      %c1_22 = arith.constant 1 : index
      %c0_23 = arith.constant 0 : index
      %c0_24 = arith.constant 0 : index
      %32 = vector.load %arg5[%c1_22, %c0_23, %c0_24] : memref<2x8x128xf32, #tpu.memory_space<vmem>>, vector<1x8x128xf32>
      %33 = vector.shape_cast %32 : vector<1x8x128xf32> to vector<8x128xf32>
      %34 = vector.shape_cast %33 : vector<8x128xf32> to vector<1x8x128xf32>
      %cst_25 = arith.constant dense<0.000000e+00> : vector<1xf32>
      %35 = vector.multi_reduction <add>, %34, %cst_25 [1, 2] : vector<1x8x128xf32> to vector<1xf32>
      %36 = vector.shape_cast %35 : vector<1xf32> to vector<1x1x1xf32>
      %37 = vector.extract %36[0, 0, 0] : f32 from vector<1x1x1xf32>
      %cst_26 = arith.constant 0.699999988 : f32
      %38 = arith.mulf %cst_26, %31 : f32
      %cst_27 = arith.constant 3.000000e-01 : f32
      %39 = arith.mulf %cst_27, %37 : f32
      %40 = arith.addf %38, %39 : f32
      %cst_28 = arith.constant 4.8828125E-4 : f32
      %41 = arith.mulf %40, %cst_28 : f32
      %42 = vector.broadcast %41 : f32 to vector<1x1x128xf32>
      %c0_29 = arith.constant 0 : index
      %c0_30 = arith.constant 0 : index
      %c0_31 = arith.constant 0 : index
      %43 = vector.load %arg4[%c0_29, %c0_30, %c0_31] : memref<1x1x128xf32, #tpu.memory_space<vmem>>, vector<1x1x128xf32>
      tpu.vector_store %arg4[%c0_29, %c0_30, %c0_31], %42 {strides = array<i32>} : memref<1x1x128xf32, #tpu.memory_space<vmem>>, vector<1x1x128xf32>,
    } else {
    }
    return
  }
  func.func @transform_0(%arg0: i32, %arg1: i32) -> (i32, i32) {
    %c1_i32 = arith.constant 1 : i32
    %0 = arith.muli %arg0, %c1_i32 : i32
    %1 = arith.addi %0, %arg1 : i32
    %c0_i32 = arith.constant 0 : i32
    %2 = arith.minsi %1, %c0_i32 : i32
    %c0_i32_0 = arith.constant 0 : i32
    %c0_i32_1 = arith.constant 0 : i32
    return %2, %c0_i32_0 : i32, i32
  }
  func.func @transform_1(%arg0: i32, %arg1: i32) -> (i32, i32) {
    %c1_i32 = arith.constant 1 : i32
    %0 = arith.muli %arg0, %c1_i32 : i32
    %1 = arith.addi %0, %arg1 : i32
    %c0_i32 = arith.constant 0 : i32
    %2 = arith.minsi %1, %c0_i32 : i32
    %c0_i32_0 = arith.constant 0 : i32
    %c0_i32_1 = arith.constant 0 : i32
    return %2, %c0_i32_0 : i32, i32
  }
  func.func @transform_2(%arg0: i32, %arg1: i32) -> (i32, i32, i32) {
    %c0_i32 = arith.constant 0 : i32
    %c0_i32_0 = arith.constant 0 : i32
    %c0_i32_1 = arith.constant 0 : i32
    return %arg0, %c0_i32, %c0_i32_0 : i32, i32, i32
  }
}

</mosaic_0001>

<llo_original>
// kernel: tpu_custom_call.1
$region0: #{tpu_custom_call.1}
  #allocation0 [shape = 'u32[]', space=smem, size = 0x4, offset = 0x4, fixed_abs, tag = 'smem constant byte address 0x4 - core index']
  #allocation1 [shape = 'u32[144,128]{1,0:T(1,128)}', space=vmem, size = 0x12000, scoped, tag = 'internal scratch']
  #allocation2 [shape = 'f32[2,8,128]{2,1,0:T(8,128)}', space=vmem, size = 0x2000, scoped, tag = 'scratch operand']
  %s0 = inlined_call_operand.hbm [shape: f32[16,128], index: 0, kind: input, shape index: {}]
  %s1 = inlined_call_operand.hbm [shape: f32[16,128], index: 1, kind: input, shape index: {}]
  %s2 = inlined_call_operand.hbm [shape: f32[1,1,128], index: 2, kind: output, shape index: {}]
  %s3 = sld [smem:[#allocation0]]
  $region34: #{tpu_custom_call.1} parent=0
    _
  %s5 = ssub.s32 1, %s3
  %s6 = scalar_select 0, %s5, %s3
  $region1: #{tpu_custom_call.1} parent=0
    #allocation3 [shape = 'u8[8192]{0}', space=vmem, size = 0x2000, scoped, tag = 'input window, operand 0, single buffered']
    #allocation4 [shape = 's32[1]{0}', space=sflag, size = 0x4, scoped, tag = 'scoped memory for tpu_custom_call.1']
    #allocation5 [shape = 's32[1]{0}', space=sflag, size = 0x4, scoped, tag = 'scoped memory for tpu_custom_call.1']
    #allocation6 [shape = 'u8[8192]{0}', space=vmem, size = 0x2000, scoped, tag = 'input window, operand 1, single buffered']
    #allocation7 [shape = 's32[1]{0}', space=sflag, size = 0x4, scoped, tag = 'scoped memory for tpu_custom_call.1']
    #allocation8 [shape = 'u8[512]{0}', space=vmem, size = 0x400, scoped, tag = 'output window, operand 0, single buffered']
    %7 = vsyncpa [#allocation4], 0
    %8 = vsyncpa [#allocation7], 0
    %9 = vsyncpa [#allocation5], 0
    // Predicated region
    $region2: #{tpu_custom_call.1} parent=1 // pred_check
      _
    $region3: #{tpu_custom_call.1} parent=1 // pred_check_branch
      %11 = sbr.rel (0) target = $region5
    $region4: #{tpu_custom_call.1} parent=1 // pred_region
      %s12 = sadd.s32 0, 0
      %p13 = scmp.lt.s32.totalorder %s12, 0
      %s14 = scalar_select %p13, %s12, 0
      %s15 = smul.u32 2, %s14
      %s17 = ssub.s32 256, 256
      %18 = vsyncadd [#allocation4], %s17
      %s19 = smul.addr %s15, 128
      %s20 = scalar_lea.hbm %s0, %s19
      %s21 = sshll.u32 [#allocation3], 4
      %s22 = int_to_ptr.vmem [resolvable:$true] %s21
      %27 = dma.hbm_to_vmem [thread:$0]  %s20, 256, %s22, [#allocation4], 128, 128, 8
    $region5: #{tpu_custom_call.1} parent=1 // pred_fallthru
      _
    // Predicated region
    $region6: #{tpu_custom_call.1} parent=1 // pred_check
      _
    $region7: #{tpu_custom_call.1} parent=1 // pred_check_branch
      %29 = sbr.rel (0) target = $region9
    $region8: #{tpu_custom_call.1} parent=1 // pred_region
      %s30 = sadd.s32 0, 0
      %p31 = scmp.lt.s32.totalorder %s30, 0
      %s32 = scalar_select %p31, %s30, 0
      %s33 = smul.u32 2, %s32
      %s35 = ssub.s32 256, 256
      %36 = vsyncadd [#allocation7], %s35
      %s37 = smul.addr %s33, 128
      %s38 = scalar_lea.hbm %s1, %s37
      %s39 = sshll.u32 [#allocation6], 4
      %s40 = int_to_ptr.vmem [resolvable:$true] %s39
      %45 = dma.hbm_to_vmem [thread:$0]  %s38, 256, %s40, [#allocation7], 128, 128, 8
    $region9: #{tpu_custom_call.1} parent=1 // pred_fallthru
      _
    // Predicated region
    $region10: #{tpu_custom_call.1} parent=1 // pred_check
      _
    $region11: #{tpu_custom_call.1} parent=1 // pred_check_branch
      %47 = sbr.rel (0) target = $region13
    $region12: #{tpu_custom_call.1} parent=1 // pred_region
      %48 = dma.done [#allocation4], 256
    $region13: #{tpu_custom_call.1} parent=1 // pred_fallthru
      _
    // Predicated region
    $region14: #{tpu_custom_call.1} parent=1 // pred_check
      _
    $region15: #{tpu_custom_call.1} parent=1 // pred_check_branch
      %50 = sbr.rel (0) target = $region17
    $region16: #{tpu_custom_call.1} parent=1 // pred_region
      %51 = dma.done [#allocation7], 256
    $region17: #{tpu_custom_call.1} parent=1 // pred_fallthru
      _
    %s52 = sadd.s32 0, 0
    %p53 = scmp.lt.s32.totalorder %s52, 0
    %s54 = scalar_select %p53, %s52, 0
    %s55 = smul.u32 2, %s54
    %s56 = sadd.s32 0, 0
    %p57 = scmp.lt.s32.totalorder %s56, 0
    %s58 = scalar_select %p57, %s56, 0
    %s59 = smul.u32 2, %s58
    %p60 = scmp.eq.s32.totalorder 0, 0
    // Predicated region
    $region18: #{tpu_custom_call.1} parent=1 // pred_check
      %p61 = pneg %p60
    $region19: #{tpu_custom_call.1} parent=1 // pred_check_branch
      %63 = sbr.rel (%p61) target = $region21
    $region20: #{tpu_custom_call.1} parent=1 // pred_region
      %64 = vst [vmem:[#allocation2] sm:$0xff] 0.0
      %65 = vst [vmem:[#allocation2 + $0x8] sm:$0xff] 0.0
    $region21: #{tpu_custom_call.1} parent=1 // pred_fallthru
      _
    %v66 = vld [vmem:[#allocation3] sm:$0xff]
    %v67 = vld [vmem:[#allocation3 + $0x8] sm:$0xff]
    %v68 = vld [vmem:[#allocation6] sm:$0xff]
    %v69 = vld [vmem:[#allocation6 + $0x8] sm:$0xff]
    %v70 = vsub.f32 %v66, %v68
    %v71 = vsub.f32 %v67, %v69
    %v72 = vld [vmem:[#allocation2] sm:$0xff]
    %v73 = vmul.f32 %v70, %v70
    %v74 = vmul.f32 %v71, %v71
    %v75 = vadd.f32 %v73, %v74
    %v76 = vadd.f32 %v72, %v75
    %77 = vst [vmem:[#allocation2] sm:$0xff] %v76
    %s78 = scalar_lea.vmem [#allocation2], 8
    %v79 = vld [vmem:[%s78] sm:$0xff]
    %v80 = vand.u32 2147483647, %v70
    %v81 = vand.u32 2147483647, %v71
    %v82 = vadd.f32 %v80, %v81
    %v83 = vadd.f32 %v79, %v82
    %84 = vst [vmem:[%s78] sm:$0xff] %v83
    // Predicated region
    $region22: #{tpu_custom_call.1} parent=1 // pred_check
      %p85 = pneg %p60
    $region23: #{tpu_custom_call.1} parent=1 // pred_check_branch
      %87 = sbr.rel (%p85) target = $region25
    $region24: #{tpu_custom_call.1} parent=1 // pred_region
      %v88 = vld [vmem:[#allocation2] sm:$0xff]
      %89 = vadd.xlane.f32.xlu0 %v88
      %v90 = vpop.xlane.xlu0 %89
      %v91 = vrot.slane %v90, 4
      %v92 = vadd.f32 %v90, %v91
      %v93 = vrot.slane %v92, 2
      %v94 = vadd.f32 %v92, %v93
      %v95 = vrot.slane %v94, 1
      %v96 = vadd.f32 %v94, %v95
      %s97 = vtos %v96
      %v98 = vld [vmem:[%s78] sm:$0xff]
      %99 = vadd.xlane.f32.xlu0 %v98
      %v100 = vpop.xlane.xlu0 %99
      %v101 = vrot.slane %v100, 4
      %v102 = vadd.f32 %v100, %v101
      %v103 = vrot.slane %v102, 2
      %v104 = vadd.f32 %v102, %v103
      %v105 = vrot.slane %v104, 1
      %v106 = vadd.f32 %v104, %v105
      %s107 = vtos %v106
      %s108 = smul.f32 %s97, 0.7
      %s109 = smul.f32 %s107, 0.3
      %s110 = sadd.f32 %s108, %s109
      %s111 = smul.f32 %s110, 0.00048828125
      %v112 = vstv %s111
      %113 = vst [vmem:[#allocation8] sm:$0x1] %v112
    $region25: #{tpu_custom_call.1} parent=1 // pred_fallthru
      _
    // Predicated region
    $region26: #{tpu_custom_call.1} parent=1 // pred_check
      _
    $region27: #{tpu_custom_call.1} parent=1 // pred_check_branch
      %115 = sbr.rel (0) target = $region29
    $region28: #{tpu_custom_call.1} parent=1 // pred_region
      %s117 = ssub.s32 16, 16
      %118 = vsyncadd [#allocation5], %s117
      %s120 = sshll.u32 [#allocation8], 4
      %s121 = int_to_ptr.vmem [resolvable:$true] %s120
      %123 = dma.vmem_to_hbm [thread:$0]  %s121, 16, %s2, [#allocation5]
    $region29: #{tpu_custom_call.1} parent=1 // pred_fallthru
      _
    // Predicated region
    $region30: #{tpu_custom_call.1} parent=1 // pred_check
      _
    $region31: #{tpu_custom_call.1} parent=1 // pred_check_branch
      %125 = sbr.rel (0) target = $region33
    $region32: #{tpu_custom_call.1} parent=1 // pred_region
      %126 = dma.done [#allocation5], 16
    $region33: #{tpu_custom_call.1} parent=1 // pred_fallthru
      _
    %127 = vsyncpa [#allocation4], 1
    %128 = vsyncpa [#allocation7], 1
    %129 = vsyncpa [#allocation5], 1

</llo_original>
